<compile_context>
chip_gen: v5e
topology: v5e:2x2
jax: 0.10.0
libtpu: 0.0.40
codegen_flags: <defaults>
</compile_context>

<pallas_src>
import math

import jax
import jax.numpy as jnp
from jax.experimental import pallas as pl
from jax.experimental.pallas import tpu as pltpu


# ----------------------------------------------------------------------------
# Parameter / buffer setup (glue, plain JAX) — matches nn.Module.__init__
# ----------------------------------------------------------------------------
def build_positional_encoding_table(max_len: int, d_model: int,
                                    dtype=jnp.float32) -> jnp.ndarray:
    """pe[pos, 2i]   = sin(pos * exp(2i * -ln(10000)/d_model))
       pe[pos, 2i+1] = cos(pos * exp(2i * -ln(10000)/d_model))   (even d_model)"""
    position = jnp.arange(max_len, dtype=jnp.float32)[:, None]          # (L, 1)
    div_term = jnp.exp(jnp.arange(0, d_model, 2, dtype=jnp.float32)
                       * (-math.log(10000.0) / d_model))                 # (D/2,)
    angles = position * div_term                                         # (L, D/2)
    pe = jnp.zeros((max_len, d_model), dtype=jnp.float32)
    pe = pe.at[:, 0::2].set(jnp.sin(angles))
    pe = pe.at[:, 1::2].set(jnp.cos(angles))
    return pe.astype(dtype)


# ----------------------------------------------------------------------------
# Pallas kernels (pure elementwise hot path on flattened (B, S*D) layout)
# ----------------------------------------------------------------------------
def _pe_add_kernel(x_ref, pe_ref, o_ref):
    # x_ref: (TB, TN) tile, pe_ref: (1, TN) tile (sublane-broadcast over batch).
    o_ref[...] = x_ref[...] + pe_ref[...]


def _pe_add_dropout_kernel(x_ref, pe_ref, m_ref, o_ref):
    # m_ref already holds keep/(1-p), so the epilogue is a single multiply.
    o_ref[...] = (x_ref[...] + pe_ref[...]) * m_ref[...]


# ----------------------------------------------------------------------------
# Tile selection: keep each x/out/mask tile at ~1 MiB so the double-buffered
# footprint stays far below every generation's scoped-VMEM limit.
# ----------------------------------------------------------------------------
_LANE = 128
_SUBLANE = 8
_TILE_BYTES_BUDGET = 1 << 20   # ~1 MiB per (TB, TN) tile


def _choose_tiles(B: int, N: int, itemsize: int):
    tb = B if B < _SUBLANE else _SUBLANE            # multiple of 8, or the full dim
    if N % _LANE == 0:
        max_elems = max(_LANE, _TILE_BYTES_BUDGET // (itemsize * tb))
        tn = min(N, (max_elems // _LANE) * _LANE)   # lane-dense multiple of 128
    else:
        # TODO(synk): pad S*D up to a multiple of 128 instead of taking the full
        # row when it is not 128-aligned (rare for transformer shapes).
        tn = N                                      # full dim is always legal
    return tb, tn


# ----------------------------------------------------------------------------
# Wrapper — equivalent of PositionalEncoding.forward(x)
# ----------------------------------------------------------------------------
def positional_encoding_forward(x, pe, *, p: float = 0.1,
                                training: bool = False, rng=None):
    """training=False -> x + pe[:, :S, :]          (dropout is identity, eval mode)
       training=True  -> dropout(x + pe[:, :S, :]) (inverted-dropout scaling)"""
    B, S, D = x.shape
    N = S * D
    x2 = x.reshape(B, N)                            # lane-dense layout
    pe2 = pe[:S, :].astype(x.dtype).reshape(1, N)   # stream PE in x's dtype

    itemsize = x.dtype.itemsize
    tb, tn = _choose_tiles(B, N, itemsize)
    grid = (pl.cdiv(N, tn), pl.cdiv(B, tb))         # batch innermost -> PE tile resident

    x_spec = pl.BlockSpec((tb, tn), lambda ni, bi: (bi, ni))
    pe_spec = pl.BlockSpec((1, tn), lambda ni, bi: (0, ni))
    out_spec = pl.BlockSpec((tb, tn), lambda ni, bi: (bi, ni))
    out_shape = jax.ShapeDtypeStruct((B, N), x.dtype)
    cparams = pltpu.CompilerParams(
        dimension_semantics=("parallel", "parallel"))

    if (not training) or p == 0.0:
        out2 = pl.pallas_call(
            _pe_add_kernel,
            out_shape=out_shape,
            grid=grid,
            in_specs=[x_spec, pe_spec],
            out_specs=out_spec,
            compiler_params=cparams,
            cost_estimate=pl.CostEstimate(
                flops=B * N, transcendentals=0,
                bytes_accessed=(2 * B * N + N) * itemsize),
        )(x2, pe2)
        return out2.reshape(B, S, D)

    if p >= 1.0:                                    # everything dropped
        return jnp.zeros_like(x)

    if rng is None:
        rng = jax.random.PRNGKey(0)
    keep = jax.random.bernoulli(rng, 1.0 - p, (B, N))
    mask = keep.astype(x.dtype) * jnp.asarray(1.0 / (1.0 - p), dtype=x.dtype)

    out2 = pl.pallas_call(
        _pe_add_dropout_kernel,
        out_shape=out_shape,
        grid=grid,
        in_specs=[x_spec, pe_spec, x_spec],
        out_specs=out_spec,
        compiler_params=cparams,
        cost_estimate=pl.CostEstimate(
            flops=2 * B * N, transcendentals=0,
            bytes_accessed=(3 * B * N + N) * itemsize),
    )(x2, pe2, mask)
    return out2.reshape(B, S, D)


# ----------------------------------------------------------------------------
# Demo / self-check
# ----------------------------------------------------------------------------
if __name__ == "__main__":
    B, S, D = 2, 8, 32            # batch, seq_len, d_model (even, as in torch init)
    MAX_LEN = 5000
    P_DROP = 0.1

    key = jax.random.PRNGKey(0)
    k_x, k_drop = jax.random.split(key)
    x = jax.random.normal(k_x, (B, S, D), dtype=jnp.float32)

    pe = build_positional_encoding_table(MAX_LEN, D)       # deterministic buffer
    ref = x + pe[None, :S, :]                               # plain-JAX reference

    # Eval-mode forward (dropout == identity): exact check against reference.
    y_eval = positional_encoding_forward(x, pe, p=P_DROP, training=False)
    jax.block_until_ready(y_eval)
    assert y_eval.shape == (B, S, D) and y_eval.dtype == x.dtype
    assert jnp.allclose(y_eval, ref, atol=1e-5, rtol=1e-5), "eval-mode mismatch"

    # Training-mode forward: every element must be either 0 (dropped) or
    # (x + pe) / (1 - p) (kept, inverted-dropout scaling).
    y_train = positional_encoding_forward(x, pe, p=P_DROP, training=True,
                                          rng=k_drop)
    jax.block_until_ready(y_train)
    assert y_train.shape == (B, S, D)
    scale = 1.0 / (1.0 - P_DROP)
    ok = (jnp.isclose(y_train, ref * scale, atol=1e-5, rtol=1e-5)
          | jnp.isclose(y_train, 0.0, atol=1e-7))
    assert bool(jnp.all(ok)), "training-mode dropout semantics mismatch"

    print("KERNEL_OK")
</pallas_src>

<mosaic_0001>
module attributes {stable_mosaic.version = 11 : i64} {
  func.func @_pe_add_kernel(%arg0: i32, %arg1: i32, %arg2: memref<2x256xf32, #tpu.memory_space<vmem>>, %arg3: memref<1x256xf32, #tpu.memory_space<vmem>>, %arg4: memref<2x256xf32, #tpu.memory_space<vmem>>) attributes {dimension_semantics = [#tpu.dimension_semantics<parallel>, #tpu.dimension_semantics<parallel>], iteration_bounds = array<i64: 1, 1>, scalar_prefetch = 0 : i64, scratch_operands = 0 : i64, tpu.core_type = #tpu.core_type<tc>, window_params = [{transform_indices = @transform_0, window_bounds = array<i64: 2, 256>}, {transform_indices = @transform_1, window_bounds = array<i64: 1, 256>}, {transform_indices = @transform_2, window_bounds = array<i64: 2, 256>}]} {
    %c0 = arith.constant 0 : index
    %c0_0 = arith.constant 0 : index
    %0 = vector.load %arg2[%c0, %c0_0] : memref<2x256xf32, #tpu.memory_space<vmem>>, vector<2x256xf32>
    %c0_1 = arith.constant 0 : index
    %c0_2 = arith.constant 0 : index
    %1 = vector.load %arg3[%c0_1, %c0_2] : memref<1x256xf32, #tpu.memory_space<vmem>>, vector<1x256xf32>
    %2 = vector.broadcast %1 : vector<1x256xf32> to vector<2x256xf32>
    %3 = arith.addf %0, %2 : vector<2x256xf32>
    %c0_3 = arith.constant 0 : index
    %c0_4 = arith.constant 0 : index
    %4 = vector.load %arg4[%c0_3, %c0_4] : memref<2x256xf32, #tpu.memory_space<vmem>>, vector<2x256xf32>
    tpu.vector_store %arg4[%c0_3, %c0_4], %3 {strides = array<i32>} : memref<2x256xf32, #tpu.memory_space<vmem>>, vector<2x256xf32>,
    return
  }
  func.func @transform_0(%arg0: i32, %arg1: i32) -> (i32, i32) {
    %c0_i32 = arith.constant 0 : i32
    return %arg1, %arg0 : i32, i32
  }
  func.func @transform_1(%arg0: i32, %arg1: i32) -> (i32, i32) {
    %c0_i32 = arith.constant 0 : i32
    %c0_i32_0 = arith.constant 0 : i32
    return %c0_i32, %arg0 : i32, i32
  }
  func.func @transform_2(%arg0: i32, %arg1: i32) -> (i32, i32) {
    %c0_i32 = arith.constant 0 : i32
    return %arg1, %arg0 : i32, i32
  }
}

</mosaic_0001>

<llo_original>
// kernel: tpu_custom_call.1
$region0: #{tpu_custom_call.1}
  #allocation0 [shape = 'u32[]', space=smem, size = 0x4, offset = 0x4, fixed_abs, tag = 'smem constant byte address 0x4 - core index']
  #allocation1 [shape = 'u32[72,128]{1,0:T(1,128)}', space=vmem, size = 0x9000, scoped, tag = 'internal scratch']
  %s0 = inlined_call_operand.hbm [shape: f32[2,256], index: 0, kind: input, shape index: {}]
  %s1 = inlined_call_operand.hbm [shape: f32[1,256], index: 1, kind: input, shape index: {}]
  %s2 = inlined_call_operand.hbm [shape: f32[2,256], index: 2, kind: output, shape index: {}]
  %s3 = sld [smem:[#allocation0]]
  $region26: #{tpu_custom_call.1} parent=0
    _
  %s5 = ssub.s32 1, %s3
  %s6 = scalar_select 0, %s5, %s3
  $region1: #{tpu_custom_call.1} parent=0
    #allocation2 [shape = 'u8[2048]{0}', space=vmem, size = 0x800, scoped, tag = 'input window, operand 0, single buffered']
    #allocation3 [shape = 's32[1]{0}', space=sflag, size = 0x4, scoped, tag = 'scoped memory for tpu_custom_call.1']
    #allocation4 [shape = 's32[1]{0}', space=sflag, size = 0x4, scoped, tag = 'scoped memory for tpu_custom_call.1']
    #allocation5 [shape = 'u8[1024]{0}', space=vmem, size = 0x400, scoped, tag = 'input window, operand 1, single buffered']
    #allocation6 [shape = 's32[1]{0}', space=sflag, size = 0x4, scoped, tag = 'scoped memory for tpu_custom_call.1']
    #allocation7 [shape = 'u8[2048]{0}', space=vmem, size = 0x800, scoped, tag = 'output window, operand 0, single buffered']
    %7 = vsyncpa [#allocation3], 0
    %8 = vsyncpa [#allocation6], 0
    %9 = vsyncpa [#allocation4], 0
    // Predicated region
    $region2: #{tpu_custom_call.1} parent=1 // pred_check
      _
    $region3: #{tpu_custom_call.1} parent=1 // pred_check_branch
      %11 = sbr.rel (0) target = $region5
    $region4: #{tpu_custom_call.1} parent=1 // pred_region
      %13 = vsyncadd [#allocation3], 0
      %s15 = sshll.u32 %s0, 4
      %s16 = int_to_ptr.hbm [resolvable:$true] %s15
      %s17 = sshll.u32 [#allocation2], 4
      %s18 = int_to_ptr.vmem [resolvable:$true] %s17
      %20 = dma.hbm_to_vmem [thread:$0]  %s16, 64, %s18, [#allocation3]
    $region5: #{tpu_custom_call.1} parent=1 // pred_fallthru
      _
    // Predicated region
    $region6: #{tpu_custom_call.1} parent=1 // pred_check
      _
    $region7: #{tpu_custom_call.1} parent=1 // pred_check_branch
      %22 = sbr.rel (0) target = $region9
    $region8: #{tpu_custom_call.1} parent=1 // pred_region
      %24 = vsyncadd [#allocation6], 0
      %s26 = sshll.u32 %s1, 4
      %s27 = int_to_ptr.hbm [resolvable:$true] %s26
      %s28 = sshll.u32 [#allocation5], 4
      %s29 = int_to_ptr.vmem [resolvable:$true] %s28
      %31 = dma.hbm_to_vmem [thread:$0]  %s27, 32, %s29, [#allocation6]
    $region9: #{tpu_custom_call.1} parent=1 // pred_fallthru
      _
    // Predicated region
    $region10: #{tpu_custom_call.1} parent=1 // pred_check
      _
    $region11: #{tpu_custom_call.1} parent=1 // pred_check_branch
      %33 = sbr.rel (0) target = $region13
    $region12: #{tpu_custom_call.1} parent=1 // pred_region
      %35 = dma.done [#allocation3], 64
    $region13: #{tpu_custom_call.1} parent=1 // pred_fallthru
      _
    // Predicated region
    $region14: #{tpu_custom_call.1} parent=1 // pred_check
      _
    $region15: #{tpu_custom_call.1} parent=1 // pred_check_branch
      %37 = sbr.rel (0) target = $region17
    $region16: #{tpu_custom_call.1} parent=1 // pred_region
      %39 = dma.done [#allocation6], 32
    $region17: #{tpu_custom_call.1} parent=1 // pred_fallthru
      _
    %v40 = vld [vmem:[#allocation2] sm:$0xf]
    %v41 = vld [vmem:[#allocation5] sm:$0x3]
    %v43 = vperm.slane %v41, 0
    %v44 = vperm.slane %v41, 1
    %v45 = vrot.slane %v44, 6
    %vm46 = vcmask 1041408
    %v47 = vsel %vm46, %v43, %v45
    %v49 = vadd.f32 %v40, %v47
    %50 = vst [vmem:[#allocation7] sm:$0xf] %v49
    // Predicated region
    $region18: #{tpu_custom_call.1} parent=1 // pred_check
      _
    $region19: #{tpu_custom_call.1} parent=1 // pred_check_branch
      %52 = sbr.rel (0) target = $region21
    $region20: #{tpu_custom_call.1} parent=1 // pred_region
      %54 = vsyncadd [#allocation4], 0
      %s56 = sshll.u32 [#allocation7], 4
      %s57 = int_to_ptr.vmem [resolvable:$true] %s56
      %s58 = sshll.u32 %s2, 4
      %s59 = int_to_ptr.hbm [resolvable:$true] %s58
      %61 = dma.vmem_to_hbm [thread:$0]  %s57, 64, %s59, [#allocation4]
    $region21: #{tpu_custom_call.1} parent=1 // pred_fallthru
      _
    // Predicated region
    $region22: #{tpu_custom_call.1} parent=1 // pred_check
      _
    $region23: #{tpu_custom_call.1} parent=1 // pred_check_branch
      %63 = sbr.rel (0) target = $region25
    $region24: #{tpu_custom_call.1} parent=1 // pred_region
      %65 = dma.done [#allocation4], 64
    $region25: #{tpu_custom_call.1} parent=1 // pred_fallthru
      _
    %66 = vsyncpa [#allocation3], 1
    %67 = vsyncpa [#allocation6], 1
    %68 = vsyncpa [#allocation4], 1

</llo_original>
